<compile_context>
chip_gen: v6e
topology: v6e:2x2x1
jax: 0.10.0
libtpu: 0.0.40
codegen_flags: <defaults>
</compile_context>

<pallas_src>
import functools
import math

import jax
import jax.numpy as jnp
from jax import lax
from jax.experimental import pallas as pl
from jax.experimental.pallas import tpu as pltpu


def _moe_gate_kernel(x_ref, w_ref, *out_refs, top_k: int, norm_topk: bool,
                     emit_stats: bool, seq_len: int, bsz: int):
    # x_ref:  (tm, h)   token tile (input dtype), hidden on lanes
    # w_ref:  (E, h)    full gate weight (same dtype as x)
    # outputs (lane-dense over tokens):
    #   idx_ref:  (k, tm)       top-k expert indices (int32)
    #   wgt_ref:  (k, tm)       top-k gate weights (renormalized if norm_topk)
    #   sums_ref: (1, E, bsz)   per-tile, per-batch sum of softmax scores
    #   cnts_ref: (1, E, bsz)   per-tile, per-batch top-k hit counts
    if emit_stats:
        idx_ref, wgt_ref, sums_ref, cnts_ref = out_refs
    else:
        idx_ref, wgt_ref = out_refs

    x = x_ref[...]            # (tm, h)
    w = w_ref[...]            # (E, h)

    # logits^T = w @ x^T -> (E, tm); contraction over hidden (last dim of
    # both operands), no transpose materialized, f32 MXU accumulation.
    logits = lax.dot_general(
        w, x, dimension_numbers=(((1,), (1,)), ((), ())),
        preferred_element_type=jnp.float32)                     # (E, tm) f32

    # softmax over experts (sublane axis); tokens stay on lanes.
    m = jnp.max(logits, axis=0, keepdims=True)                  # (1, tm)
    e = jnp.exp(logits - m)                                     # (E, tm)
    denom = jnp.sum(e, axis=0, keepdims=True)                   # (1, tm)
    scores = e / denom                                          # exact divide

    E, tm = scores.shape
    iota = lax.broadcasted_iota(jnp.int32, scores.shape, 0)     # expert ids

    # iterative top-k (k is tiny: unrolled python loop)
    s = scores
    idx_rows = []
    wgt_rows = []
    hit = jnp.zeros(scores.shape, jnp.float32) if emit_stats else None
    for _ in range(top_k):
        mj = jnp.max(s, axis=0, keepdims=True)                  # (1, tm)
        # first index achieving the max (tie behavior: first hit)
        ij = jnp.min(jnp.where(s == mj, iota, jnp.int32(E)),
                     axis=0, keepdims=True)                     # (1, tm)
        idx_rows.append(ij)
        wgt_rows.append(mj)
        sel = iota == ij
        if emit_stats:
            hit = hit + sel.astype(jnp.float32)
        s = jnp.where(sel, -jnp.inf, s)

    topk_w = jnp.concatenate(wgt_rows, axis=0)                  # (k, tm)
    topk_i = jnp.concatenate(idx_rows, axis=0)                  # (k, tm)

    if top_k > 1 and norm_topk:
        topk_w = topk_w / (jnp.sum(topk_w, axis=0, keepdims=True) + 1e-20)

    idx_ref[...] = topk_i
    wgt_ref[...] = topk_w.astype(wgt_ref.dtype)

    if emit_stats:
        # Per-batch one-hot over the tokens of this tile (division-free).
        # Padded tokens (global index >= bsz*seq_len) match no batch row and
        # are therefore excluded from the statistics automatically.
        base = pl.program_id(0) * tm
        t_glob = lax.broadcasted_iota(jnp.int32, (tm, bsz), 0) + base
        b_lo = lax.broadcasted_iota(jnp.int32, (tm, bsz), 1) * seq_len
        bmask = jnp.logical_and(t_glob >= b_lo, t_glob < b_lo + seq_len)
        bonehot = bmask.astype(jnp.float32)                     # (tm, bsz)

        sums_ref[0] = jnp.dot(scores, bonehot,
                              preferred_element_type=jnp.float32)   # (E, bsz)
        cnts_ref[0] = jnp.dot(hit, bonehot,
                              preferred_element_type=jnp.float32)   # (E, bsz)


def _choose_tm(n_tokens: int) -> int:
    # Large tiles amortize the ~600-cycle per-grid-step overhead, but we want
    # >= 4 grid steps where possible so v7x's two TensorCores each get >= 2
    # iterations (keeps i+1 prefetch overlap per core); same choice is also
    # fine on v5e/v6e.
    for cand in (2048, 1024, 512, 256, 128):
        if pl.cdiv(n_tokens, cand) >= 4:
            return cand
    # Small token counts: one/few 128-token tiles (wrapper pads the tail).
    return 128


def moe_gate(hidden_states, weight, *, top_k=2, norm_topk_prob=True,
             alpha=0.1, seq_aux=True, training=True, tm=None):
    """Pallas implementation of MoEGate.forward.

    Returns (topk_idx [N,k] int32, topk_weight [N,k] f32, aux_loss scalar).
    """
    bsz, seq_len, h = hidden_states.shape
    E = weight.shape[0]
    assert top_k <= E, "num_experts_per_tok must be <= n_routed_experts"
    N = bsz * seq_len

    # No activation cast in the wrapper: read x in its native dtype in-kernel
    # (a bf16 upstream producer can feed bf16 directly).  Only the tiny (E, h)
    # gate weight is cast to match.
    x_flat = hidden_states.reshape(N, h)
    w = weight.astype(x_flat.dtype)

    if tm is None:
        tm = _choose_tm(N)
    n_tiles = pl.cdiv(N, tm)
    n_pad = n_tiles * tm
    if n_pad != N:
        # Pad the tail tile instead of using one unbounded tile: keeps tiles
        # bounded, the grid >= 1 step per core, and pipelining intact.
        x_flat = jnp.pad(x_flat, ((0, n_pad - N), (0, 0)))

    need_stats = bool(training) and alpha > 0.0

    kernel = functools.partial(_moe_gate_kernel, top_k=top_k,
                               norm_topk=norm_topk_prob,
                               emit_stats=need_stats,
                               seq_len=seq_len, bsz=bsz)

    out_shape = [jax.ShapeDtypeStruct((top_k, n_pad), jnp.int32),
                 jax.ShapeDtypeStruct((top_k, n_pad), jnp.float32)]
    out_specs = [pl.BlockSpec((top_k, tm), lambda i: (0, i)),
                 pl.BlockSpec((top_k, tm), lambda i: (0, i))]
    if need_stats:
        out_shape += [jax.ShapeDtypeStruct((n_tiles, E, bsz), jnp.float32),
                      jax.ShapeDtypeStruct((n_tiles, E, bsz), jnp.float32)]
        out_specs += [pl.BlockSpec((1, E, bsz), lambda i: (i, 0, 0)),
                      pl.BlockSpec((1, E, bsz), lambda i: (i, 0, 0))]

    # Explicit VMEM budget: double-buffered tiles + temporaries headroom that
    # scales with the live (E, tm) f32 arrays.  No artificial floor beyond a
    # small safety margin; capped at 48 MiB so v7x's 64 MiB per-TC VMEM keeps
    # headroom for Mosaic internal scratch.
    isz = jnp.dtype(x_flat.dtype).itemsize
    est = (2 * tm * h * isz                     # double-buffered x tile
           + 2 * E * h * isz                    # double-buffered gate weight
           + 2 * 2 * top_k * tm * 4             # idx + weight outputs
           + (2 * 2 * E * bsz * 4 if need_stats else 0)
           + 8 * E * tm * 4                     # live f32 temporaries
           + (2 << 20))                         # fixed slack
    vmem_limit = int(min(max(est, 8 << 20), 48 << 20))

    outs = pl.pallas_call(
        kernel,
        out_shape=tuple(out_shape),
        grid_spec=pltpu.PrefetchScalarGridSpec(
            num_scalar_prefetch=0,
            grid=(n_tiles,),
            in_specs=[
                pl.BlockSpec((tm, h), lambda i: (i, 0)),   # token tile
                pl.BlockSpec((E, h), lambda i: (0, 0)),    # full gate weight
            ],
            out_specs=out_specs,
        ),
        compiler_params=pltpu.CompilerParams(
            dimension_semantics=("parallel",),
            vmem_limit_bytes=vmem_limit),
    )(x_flat, w)

    if need_stats:
        idx_t, wgt_t, sums_t, cnts_t = outs
    else:
        idx_t, wgt_t = outs

    topk_idx = idx_t[:, :N].T          # (N, k)
    topk_weight = wgt_t[:, :N].T       # (N, k)

    # Auxiliary load-balancing loss from the tiny in-kernel statistics.
    if need_stats:
        score_sum = jnp.sum(sums_t, axis=0).T     # (bsz, E) sum over seq
        count = jnp.sum(cnts_t, axis=0).T         # (bsz, E) top-k hit counts
        if seq_aux:
            ce = count / (seq_len * top_k / E)
            scores_mean = score_sum / seq_len
            aux_loss = (ce * scores_mean).sum(axis=1).mean() * alpha
        else:
            ce = count.sum(axis=0) / (N * top_k)
            Pi = score_sum.sum(axis=0) / N
            fi = ce * E
            aux_loss = (Pi * fi).sum() * alpha
    else:
        aux_loss = jnp.float32(0.0)

    return topk_idx, topk_weight, aux_loss


def _reference(hidden_states, weight, *, top_k, norm_topk_prob, alpha,
               seq_aux):
    """Pure-JAX f32 reference for the gate (mirrors the PyTorch module)."""
    bsz, seq_len, h = hidden_states.shape
    E = weight.shape[0]
    x = hidden_states.reshape(-1, h).astype(jnp.float32)
    w = weight.astype(jnp.float32)
    logits = x @ w.T
    scores = jax.nn.softmax(logits, axis=-1)
    topk_w, topk_i = lax.top_k(scores, top_k)
    if top_k > 1 and norm_topk_prob:
        topk_w = topk_w / (topk_w.sum(axis=-1, keepdims=True) + 1e-20)
    idx_aux = topk_i.reshape(bsz, -1)
    if seq_aux:
        one_hot = jax.nn.one_hot(idx_aux, E, dtype=jnp.float32)
        ce = one_hot.sum(axis=1) / (seq_len * top_k / E)
        aux = (ce * scores.reshape(bsz, seq_len, E).mean(axis=1)
               ).sum(axis=1).mean() * alpha
    else:
        mask_ce = jax.nn.one_hot(idx_aux.reshape(-1), E, dtype=jnp.float32)
        ce = mask_ce.mean(0)
        Pi = scores.mean(0)
        aux = (Pi * ce * E).sum() * alpha
    return topk_i.astype(jnp.int32), topk_w, scores, aux


if __name__ == "__main__":
    # Small config: hidden=32, n_routed_experts=4, top_k=2, bsz=2, seq=8.
    hidden_size = 32
    n_routed_experts = 4
    top_k = 2
    bsz, seq_len = 2, 8

    key = jax.random.PRNGKey(0)
    kx, kw = jax.random.split(key)

    # kaiming_uniform_(a=sqrt(5)) on (E, hidden): bound = 1/sqrt(fan_in)
    bound = 1.0 / math.sqrt(hidden_size)
    weight = jax.random.uniform(kw, (n_routed_experts, hidden_size),
                                dtype=jnp.float32, minval=-bound, maxval=bound)
    hidden_states = jax.random.normal(kx, (bsz, seq_len, hidden_size),
                                      dtype=jnp.float32)

    # Training path (emits in-kernel aux statistics).
    topk_idx, topk_weight, aux_loss = moe_gate(
        hidden_states, weight, top_k=top_k, norm_topk_prob=True,
        alpha=0.1, seq_aux=True, training=True)
    # Inference path (no stats outputs).
    inf_idx, inf_weight, inf_aux = moe_gate(
        hidden_states, weight, top_k=top_k, norm_topk_prob=True,
        alpha=0.1, seq_aux=True, training=False)
    jax.block_until_ready((topk_idx, topk_weight, aux_loss,
                           inf_idx, inf_weight, inf_aux))

    ref_idx, ref_w, ref_scores, ref_aux = _reference(
        hidden_states, weight, top_k=top_k, norm_topk_prob=True,
        alpha=0.1, seq_aux=True)

    assert bool(jnp.all((topk_idx >= 0) & (topk_idx < n_routed_experts))), \
        "expert index out of range"
    # Compare as unordered sets per token (torch.topk tie order is
    # implementation-defined; sorted=False in the module).
    assert bool(jnp.array_equal(jnp.sort(topk_idx, axis=-1),
                                jnp.sort(ref_idx, axis=-1))), \
        "top-k index mismatch"
    assert jnp.allclose(jnp.sort(topk_weight, axis=-1),
                        jnp.sort(ref_w, axis=-1), atol=1e-4), \
        "top-k weight mismatch"
    assert jnp.allclose(aux_loss, ref_aux, atol=1e-5), "aux loss mismatch"
    assert bool(jnp.array_equal(jnp.sort(inf_idx, axis=-1),
                                jnp.sort(ref_idx, axis=-1))), \
        "inference top-k index mismatch"
    assert float(inf_aux) == 0.0, "inference aux loss should be zero"

    print("KERNEL_OK")
</pallas_src>

<mosaic_0001>
module attributes {stable_mosaic.version = 11 : i64} {
  func.func @_moe_gate_kernel(%arg0: i32, %arg1: memref<128x32xf32, #tpu.memory_space<vmem>>, %arg2: memref<4x32xf32, #tpu.memory_space<vmem>>, %arg3: memref<2x128xi32, #tpu.memory_space<vmem>>, %arg4: memref<2x128xf32, #tpu.memory_space<vmem>>, %arg5: memref<1x4x2xf32, #tpu.memory_space<vmem>>, %arg6: memref<1x4x2xf32, #tpu.memory_space<vmem>>) attributes {dimension_semantics = [#tpu.dimension_semantics<parallel>], iteration_bounds = array<i64: 1>, scalar_prefetch = 0 : i64, scratch_operands = 0 : i64, tpu.core_type = #tpu.core_type<tc>, window_params = [{transform_indices = @transform_0, window_bounds = array<i64: 128, 32>}, {pipeline_mode = #tpu.pipeline_mode<synchronous>, transform_indices = @transform_1, window_bounds = array<i64: 4, 32>}, {transform_indices = @transform_2, window_bounds = array<i64: 2, 128>}, {transform_indices = @transform_3, window_bounds = array<i64: 2, 128>}, {transform_indices = @transform_4, window_bounds = array<i64: 1, 4, 2>}, {transform_indices = @transform_5, window_bounds = array<i64: 1, 4, 2>}]} {
    %c0 = arith.constant 0 : index
    %c0_0 = arith.constant 0 : index
    %0 = vector.load %arg1[%c0, %c0_0] : memref<128x32xf32, #tpu.memory_space<vmem>>, vector<128x32xf32>
    %c0_1 = arith.constant 0 : index
    %c0_2 = arith.constant 0 : index
    %1 = vector.load %arg2[%c0_1, %c0_2] : memref<4x32xf32, #tpu.memory_space<vmem>>, vector<4x32xf32>
    %cst = arith.constant dense<0.000000e+00> : vector<4x128xf32>
    %2 = tpu.matmul %1, %0, %cst {dimension_numbers = #tpu.dot_dimension_numbers<[1], [1], [0], [0], [0, 0, 1, 0], [], []>} : vector<4x32xf32>, vector<128x32xf32>, vector<4x128xf32> -> vector<4x128xf32>
    %cst_3 = arith.constant dense<0xFF800000> : vector<128xf32>
    %3 = vector.multi_reduction <maximumf>, %2, %cst_3 [0] : vector<4x128xf32> to vector<128xf32>
    %4 = vector.shape_cast %3 : vector<128xf32> to vector<1x128xf32>
    %5 = vector.broadcast %4 : vector<1x128xf32> to vector<4x128xf32>
    %6 = arith.subf %2, %5 : vector<4x128xf32>
    %7 = math.exp %6 : vector<4x128xf32>
    %cst_4 = arith.constant dense<0.000000e+00> : vector<128xf32>
    %8 = vector.multi_reduction <add>, %7, %cst_4 [0] : vector<4x128xf32> to vector<128xf32>
    %9 = vector.shape_cast %8 : vector<128xf32> to vector<1x128xf32>
    %10 = vector.broadcast %9 : vector<1x128xf32> to vector<4x128xf32>
    %11 = arith.divf %7, %10 : vector<4x128xf32>
    %12 = tpu.iota {dimensions = array<i32: 0>} : vector<4x128xi32>
    %cst_5 = arith.constant 0.000000e+00 : f32
    %13 = vector.broadcast %cst_5 : f32 to vector<4x128xf32>
    %cst_6 = arith.constant dense<0xFF800000> : vector<128xf32>
    %14 = vector.multi_reduction <maximumf>, %11, %cst_6 [0] : vector<4x128xf32> to vector<128xf32>
    %15 = vector.shape_cast %14 : vector<128xf32> to vector<1x128xf32>
    %16 = vector.broadcast %15 : vector<1x128xf32> to vector<4x128xf32>
    %17 = arith.cmpf oeq, %11, %16 : vector<4x128xf32>
    %c4_i32 = arith.constant 4 : i32
    %18 = vector.broadcast %c4_i32 : i32 to vector<4x128xi32>
    %19 = arith.select %17, %12, %18 : vector<4x128xi1>, vector<4x128xi32>
    %cst_7 = arith.constant dense<2147483647> : vector<128xi32>
    %20 = vector.multi_reduction <minsi>, %19, %cst_7 [0] : vector<4x128xi32> to vector<128xi32>
    %21 = vector.shape_cast %20 : vector<128xi32> to vector<1x128xi32>
    %22 = vector.broadcast %21 : vector<1x128xi32> to vector<4x128xi32>
    %23 = arith.cmpi eq, %12, %22 : vector<4x128xi32>
    %24 = arith.extui %23 : vector<4x128xi1> to vector<4x128xi32>
    %25 = arith.sitofp %24 : vector<4x128xi32> to vector<4x128xf32>
    %26 = arith.addf %13, %25 : vector<4x128xf32>
    %cst_8 = arith.constant 0xFF800000 : f32
    %27 = vector.broadcast %cst_8 : f32 to vector<4x128xf32>
    %28 = arith.select %23, %27, %11 : vector<4x128xi1>, vector<4x128xf32>
    %cst_9 = arith.constant dense<0xFF800000> : vector<128xf32>
    %29 = vector.multi_reduction <maximumf>, %28, %cst_9 [0] : vector<4x128xf32> to vector<128xf32>
    %30 = vector.shape_cast %29 : vector<128xf32> to vector<1x128xf32>
    %31 = vector.broadcast %30 : vector<1x128xf32> to vector<4x128xf32>
    %32 = arith.cmpf oeq, %28, %31 : vector<4x128xf32>
    %c4_i32_10 = arith.constant 4 : i32
    %33 = vector.broadcast %c4_i32_10 : i32 to vector<4x128xi32>
    %34 = arith.select %32, %12, %33 : vector<4x128xi1>, vector<4x128xi32>
    %cst_11 = arith.constant dense<2147483647> : vector<128xi32>
    %35 = vector.multi_reduction <minsi>, %34, %cst_11 [0] : vector<4x128xi32> to vector<128xi32>
    %36 = vector.shape_cast %35 : vector<128xi32> to vector<1x128xi32>
    %37 = vector.broadcast %36 : vector<1x128xi32> to vector<4x128xi32>
    %38 = arith.cmpi eq, %12, %37 : vector<4x128xi32>
    %39 = arith.extui %38 : vector<4x128xi1> to vector<4x128xi32>
    %40 = arith.sitofp %39 : vector<4x128xi32> to vector<4x128xf32>
    %41 = arith.addf %26, %40 : vector<4x128xf32>
    %42 = tpu.concatenate %15, %30 in 0 : vector<1x128xf32>, vector<1x128xf32> -> vector<2x128xf32>
    %43 = tpu.concatenate %21, %36 in 0 : vector<1x128xi32>, vector<1x128xi32> -> vector<2x128xi32>
    %cst_12 = arith.constant dense<0.000000e+00> : vector<128xf32>
    %44 = vector.multi_reduction <add>, %42, %cst_12 [0] : vector<2x128xf32> to vector<128xf32>
    %45 = vector.shape_cast %44 : vector<128xf32> to vector<1x128xf32>
    %cst_13 = arith.constant 9.99999968E-21 : f32
    %46 = vector.broadcast %cst_13 : f32 to vector<1x128xf32>
    %47 = arith.addf %45, %46 : vector<1x128xf32>
    %48 = vector.broadcast %47 : vector<1x128xf32> to vector<2x128xf32>
    %49 = arith.divf %42, %48 : vector<2x128xf32>
    %c0_14 = arith.constant 0 : index
    %c0_15 = arith.constant 0 : index
    %50 = vector.load %arg3[%c0_14, %c0_15] : memref<2x128xi32, #tpu.memory_space<vmem>>, vector<2x128xi32>
    tpu.vector_store %arg3[%c0_14, %c0_15], %43 {strides = array<i32>} : memref<2x128xi32, #tpu.memory_space<vmem>>, vector<2x128xi32>,
    %c0_16 = arith.constant 0 : index
    %c0_17 = arith.constant 0 : index
    %51 = vector.load %arg4[%c0_16, %c0_17] : memref<2x128xf32, #tpu.memory_space<vmem>>, vector<2x128xf32>
    tpu.vector_store %arg4[%c0_16, %c0_17], %49 {strides = array<i32>} : memref<2x128xf32, #tpu.memory_space<vmem>>, vector<2x128xf32>,
    %c128_i32 = arith.constant 128 : i32
    %52 = arith.muli %arg0, %c128_i32 : i32
    %53 = tpu.iota {dimensions = array<i32: 0>} : vector<128x2xi32>
    %54 = vector.broadcast %52 : i32 to vector<128x2xi32>
    %55 = arith.addi %53, %54 : vector<128x2xi32>
    %56 = tpu.iota {dimensions = array<i32: 1>} : vector<128x2xi32>
    %c8_i32 = arith.constant 8 : i32
    %57 = vector.broadcast %c8_i32 : i32 to vector<128x2xi32>
    %58 = arith.muli %56, %57 : vector<128x2xi32>
    %59 = arith.cmpi sge, %55, %58 : vector<128x2xi32>
    %c8_i32_18 = arith.constant 8 : i32
    %60 = vector.broadcast %c8_i32_18 : i32 to vector<128x2xi32>
    %61 = arith.addi %58, %60 : vector<128x2xi32>
    %62 = arith.cmpi slt, %55, %61 : vector<128x2xi32>
    %63 = arith.andi %59, %62 : vector<128x2xi1>
    %64 = arith.extui %63 : vector<128x2xi1> to vector<128x2xi32>
    %65 = arith.sitofp %64 : vector<128x2xi32> to vector<128x2xf32>
    %cst_19 = arith.constant dense<0.000000e+00> : vector<4x2xf32>
    %66 = tpu.matmul %11, %65, %cst_19 {dimension_numbers = #tpu.dot_dimension_numbers<[1], [0], [0], [1], [0, 0, 1, 1], [], []>} : vector<4x128xf32>, vector<128x2xf32>, vector<4x2xf32> -> vector<4x2xf32>
    %c0_20 = arith.constant 0 : index
    %c0_21 = arith.constant 0 : index
    %c0_22 = arith.constant 0 : index
    %67 = vector.load %arg5[%c0_20, %c0_21, %c0_22] : memref<1x4x2xf32, #tpu.memory_space<vmem>>, vector<1x4x2xf32>
    %68 = vector.shape_cast %67 : vector<1x4x2xf32> to vector<4x2xf32>
    %69 = vector.shape_cast %66 : vector<4x2xf32> to vector<1x4x2xf32>
    tpu.vector_store %arg5[%c0_20, %c0_21, %c0_22], %69 {strides = array<i32>} : memref<1x4x2xf32, #tpu.memory_space<vmem>>, vector<1x4x2xf32>,
    %cst_23 = arith.constant dense<0.000000e+00> : vector<4x2xf32>
    %70 = tpu.matmul %41, %65, %cst_23 {dimension_numbers = #tpu.dot_dimension_numbers<[1], [0], [0], [1], [0, 0, 1, 1], [], []>} : vector<4x128xf32>, vector<128x2xf32>, vector<4x2xf32> -> vector<4x2xf32>
    %c0_24 = arith.constant 0 : index
    %c0_25 = arith.constant 0 : index
    %c0_26 = arith.constant 0 : index
    %71 = vector.load %arg6[%c0_24, %c0_25, %c0_26] : memref<1x4x2xf32, #tpu.memory_space<vmem>>, vector<1x4x2xf32>
    %72 = vector.shape_cast %71 : vector<1x4x2xf32> to vector<4x2xf32>
    %73 = vector.shape_cast %70 : vector<4x2xf32> to vector<1x4x2xf32>
    tpu.vector_store %arg6[%c0_24, %c0_25, %c0_26], %73 {strides = array<i32>} : memref<1x4x2xf32, #tpu.memory_space<vmem>>, vector<1x4x2xf32>,
    return
  }
  func.func @transform_0(%arg0: i32) -> (i32, i32) {
    %c0_i32 = arith.constant 0 : i32
    %c0_i32_0 = arith.constant 0 : i32
    return %arg0, %c0_i32 : i32, i32
  }
  func.func @transform_1(%arg0: i32) -> (i32, i32) {
    %c0_i32 = arith.constant 0 : i32
    %c0_i32_0 = arith.constant 0 : i32
    %c0_i32_1 = arith.constant 0 : i32
    return %c0_i32, %c0_i32_0 : i32, i32
  }
  func.func @transform_2(%arg0: i32) -> (i32, i32) {
    %c0_i32 = arith.constant 0 : i32
    %c0_i32_0 = arith.constant 0 : i32
    return %c0_i32, %arg0 : i32, i32
  }
  func.func @transform_3(%arg0: i32) -> (i32, i32) {
    %c0_i32 = arith.constant 0 : i32
    %c0_i32_0 = arith.constant 0 : i32
    return %c0_i32, %arg0 : i32, i32
  }
  func.func @transform_4(%arg0: i32) -> (i32, i32, i32) {
    %c0_i32 = arith.constant 0 : i32
    %c0_i32_0 = arith.constant 0 : i32
    %c0_i32_1 = arith.constant 0 : i32
    return %arg0, %c0_i32, %c0_i32_0 : i32, i32, i32
  }
  func.func @transform_5(%arg0: i32) -> (i32, i32, i32) {
    %c0_i32 = arith.constant 0 : i32
    %c0_i32_0 = arith.constant 0 : i32
    %c0_i32_1 = arith.constant 0 : i32
    return %arg0, %c0_i32, %c0_i32_0 : i32, i32, i32
  }
}

</mosaic_0001>

<llo_original>
// kernel: tpu_custom_call.1
$region0: #{tpu_custom_call.1}
  #allocation0 [shape = 'u32[]', space=smem, size = 0x4, offset = 0x4, fixed_abs, tag = 'smem constant byte address 0x4 - core index']
  #allocation1 [shape = 'u32[144,128]{1,0:T(1,128)}', space=vmem, size = 0x12000, scoped, tag = 'internal scratch']
  %s0 = inlined_call_operand.vmem [shape: f32[128,32], index: 0, kind: input, shape index: {}]
  %s1 = inlined_call_operand.vmem [shape: f32[4,32], index: 1, kind: input, shape index: {}]
  %s2 = inlined_call_operand.hbm [shape: s32[2,128], index: 2, kind: output, shape index: {0}]
  %s3 = inlined_call_operand.hbm [shape: f32[2,128], index: 3, kind: output, shape index: {1}]
  %s4 = inlined_call_operand.vmem [shape: f32[1,4,2], index: 4, kind: output, shape index: {2}]
  %s5 = inlined_call_operand.vmem [shape: f32[1,4,2], index: 5, kind: output, shape index: {3}]
  %6 = xla_tuple %s2, %s3, %s4, %s5
  %s7 = sld [smem:[#allocation0]]
  $region42: #{tpu_custom_call.1} parent=0
    _
  %s9 = ssub.s32 1, %s7
  %s10 = scalar_select 0, %s9, %s7
  $region1: #{tpu_custom_call.1} parent=0
    #allocation2 [shape = 'u8[1024]{0}', space=vmem, size = 0x400, scoped, tag = 'output window, operand 0, single buffered']
    #allocation3 [shape = 's32[1]{0}', space=sflag, size = 0x4, scoped, tag = 'scoped memory for tpu_custom_call.1']
    #allocation4 [shape = 'u8[1024]{0}', space=vmem, size = 0x400, scoped, tag = 'output window, operand 1, single buffered']
    #allocation5 [shape = 's32[1]{0}', space=sflag, size = 0x4, scoped, tag = 'scoped memory for tpu_custom_call.1']
    %11 = vsyncpa [#allocation3], 0
    %12 = vsyncpa [#allocation5], 0
    // Predicated region
    $region2: #{tpu_custom_call.1} parent=1 // pred_check
      _
    $region3: #{tpu_custom_call.1} parent=1 // pred_check_branch
      %14 = sbr.rel (0) target = $region5
    $region4: #{tpu_custom_call.1} parent=1 // pred_region
      _
    $region5: #{tpu_custom_call.1} parent=1 // pred_fallthru
      _
    // Predicated region
    $region6: #{tpu_custom_call.1} parent=1 // pred_check
      _
    $region7: #{tpu_custom_call.1} parent=1 // pred_check_branch
      %16 = sbr.rel (0) target = $region9
    $region8: #{tpu_custom_call.1} parent=1 // pred_region
      _
    $region9: #{tpu_custom_call.1} parent=1 // pred_fallthru
      _
    %v17 = vld [vmem:[%s0] sm:$0xff]
    %v18 = vld [vmem:[%s0 + $0x8] sm:$0xff]
    %v19 = vld [vmem:[%s0 + $0x10] sm:$0xff]
    %v20 = vld [vmem:[%s0 + $0x18] sm:$0xff]
    %v21 = vld [vmem:[%s0 + $0x20] sm:$0xff]
    %v22 = vld [vmem:[%s0 + $0x28] sm:$0xff]
    %v23 = vld [vmem:[%s0 + $0x30] sm:$0xff]
    %v24 = vld [vmem:[%s0 + $0x38] sm:$0xff]
    %v25 = vld [vmem:[%s0 + $0x40] sm:$0xff]
    %v26 = vld [vmem:[%s0 + $0x48] sm:$0xff]
    %v27 = vld [vmem:[%s0 + $0x50] sm:$0xff]
    %v28 = vld [vmem:[%s0 + $0x58] sm:$0xff]
    %v29 = vld [vmem:[%s0 + $0x60] sm:$0xff]
    %v30 = vld [vmem:[%s0 + $0x68] sm:$0xff]
    %v31 = vld [vmem:[%s0 + $0x70] sm:$0xff]
    %v32 = vld [vmem:[%s0 + $0x78] sm:$0xff]
    %v33 = vld [vmem:[%s1] sm:$0xf]
    %vm34 = vcmask 261120
    %v36 = vsel %vm34, %v33, 0
    %v39 = vsel %vm34, %v17, 0
    %v42 = vsel %vm34, %v18, 0
    %v45 = vsel %vm34, %v19, 0
    %v48 = vsel %vm34, %v20, 0
    %v51 = vsel %vm34, %v21, 0
    %v54 = vsel %vm34, %v22, 0
    %v57 = vsel %vm34, %v23, 0
    %v60 = vsel %vm34, %v24, 0
    %v63 = vsel %vm34, %v25, 0
    %v66 = vsel %vm34, %v26, 0
    %v69 = vsel %vm34, %v27, 0
    %v72 = vsel %vm34, %v28, 0
    %v75 = vsel %vm34, %v29, 0
    %v78 = vsel %vm34, %v30, 0
    %v81 = vsel %vm34, %v31, 0
    %v84 = vsel %vm34, %v32, 0
    %86 = vmatprep.subr.mxu0 0.0
    %87 = vmatpush1.xpose.msra.mxu0 %v84
    %88 = vmatprep.subr.mxu0 0.0
    %89 = vmatpush1.xpose.msra.mxu0 %v81
    %90 = vmatprep.subr.mxu0 0.0
    %91 = vmatpush1.xpose.msra.mxu0 %v78
    %92 = vmatprep.subr.mxu0 0.0
    %93 = vmatpush1.xpose.msra.mxu0 %v75
    %94 = vmatprep.subr.mxu0 0.0
    %95 = vmatpush1.xpose.msra.mxu0 %v72
    %96 = vmatprep.subr.mxu0 0.0
    %97 = vmatpush1.xpose.msra.mxu0 %v69
    %98 = vmatprep.subr.mxu0 0.0
    %99 = vmatpush1.xpose.msra.mxu0 %v66
    %100 = vmatprep.subr.mxu0 0.0
    %101 = vmatpush1.xpose.msra.mxu0 %v63
    %102 = vmatprep.subr.mxu0 0.0
    %103 = vmatpush1.xpose.msra.mxu0 %v60
    %104 = vmatprep.subr.mxu0 0.0
    %105 = vmatpush1.xpose.msra.mxu0 %v57
    %106 = vmatprep.subr.mxu0 0.0
    %107 = vmatpush1.xpose.msra.mxu0 %v54
    %108 = vmatprep.subr.mxu0 0.0
    %109 = vmatpush1.xpose.msra.mxu0 %v51
    %110 = vmatprep.subr.mxu0 0.0
    %111 = vmatpush1.xpose.msra.mxu0 %v48
    %112 = vmatprep.subr.mxu0 0.0
    %113 = vmatpush1.xpose.msra.mxu0 %v45
    %114 = vmatprep.subr.mxu0 0.0
    %115 = vmatpush1.xpose.msra.mxu0 %v42
    %116 = vmatprep.subr.mxu0 0.0
    %117 = vmatpush1.xpose.msra.mxu0 %v39
    %118 = vmatprep.subr.mxu0 0.0
    %119 = vmatpush2.xpose.msra.mxu0 0.0
    %120 = vmatprep.subr.mxu0 0.0
    %121 = vmatpush2.xpose.msra.mxu0 0.0
    %122 = vmatprep.subr.mxu0 0.0
    %123 = vmatpush2.xpose.msra.mxu0 0.0
    %124 = vmatprep.subr.mxu0 0.0
    %125 = vmatpush2.xpose.msra.mxu0 0.0
    %126 = vmatprep.subr.mxu0 0.0
    %127 = vmatpush2.xpose.msra.mxu0 0.0
    %128 = vmatprep.subr.mxu0 0.0
    %129 = vmatpush2.xpose.msra.mxu0 0.0
    %130 = vmatprep.subr.mxu0 0.0
    %131 = vmatpush2.xpose.msra.mxu0 0.0
    %132 = vmatprep.subr.mxu0 0.0
    %133 = vmatpush2.xpose.msra.mxu0 0.0
    %134 = vmatprep.subr.mxu0 0.0
    %135 = vmatpush2.xpose.msra.mxu0 0.0
    %136 = vmatprep.subr.mxu0 0.0
    %137 = vmatpush2.xpose.msra.mxu0 0.0
    %138 = vmatprep.subr.mxu0 0.0
    %139 = vmatpush2.xpose.msra.mxu0 0.0
    %140 = vmatprep.subr.mxu0 0.0
    %141 = vmatpush2.xpose.msra.mxu0 0.0
    %142 = vmatprep.subr.mxu0 0.0
    %143 = vmatpush2.xpose.msra.mxu0 0.0
    %144 = vmatprep.subr.mxu0 0.0
    %145 = vmatpush2.xpose.msra.mxu0 0.0
    %146 = vmatprep.subr.mxu0 0.0
    %147 = vmatpush2.xpose.msra.mxu0 0.0
    %148 = vmatprep.subr.mxu0 0.0
    %149 = vmatpush2.xpose.msra.mxu0 0.0
    %150 = vmatprep.mubr.f32.mxu0 0.0
    %151 = vmatmul.mubr.f32.gmra.mxu0 %v36
    %v152 = vpop.f32.mrf.mxu0
    %v153 = vadd.f32 0.0, %v152
    %v154 = vpop.f32.mrf.mxu0
    %155 = vdwg.mxu0
    %vm156 = vcmask 1043456
    %v157 = vsel %vm156, %v153, -inf
    %v158 = vrot.slane %v157, 4
    %v159 = vmax.f32 %v157, %v158
    %v160 = vrot.slane %v159, 2
    %v161 = vmax.f32 %v159, %v160
    %v162 = vrot.slane %v161, 1
    %v163 = vmax.f32 %v161, %v162
    %v164 = vsub.f32 %v153, %v163
    %v165 = vmul.f32 %v164, 1.442695
    %v166 = vpow.pop %v165
    %v167 = vsel %vm156, %v166, 0.0
    %v168 = vrot.slane %v167, 4
    %v169 = vadd.f32 %v167, %v168
    %v170 = vrot.slane %v169, 2
    %v171 = vadd.f32 %v169, %v170
    %v172 = vrot.slane %v171, 1
    %v173 = vadd.f32 %v171, %v172
    %v174 = vrcp.pop %v173
    %v175 = vmul.f32 %v166, %v174
    %v176 = vlaneseq
    %v177 = vshrl.u32 %v176, 7
    %v178 = vsel %vm156, %v175, -inf
    %v179 = vrot.slane %v178, 4
    %v180 = vmax.f32 %v178, %v179
    %v181 = vrot.slane %v180, 2
    %v182 = vmax.f32 %v180, %v181
    %v183 = vrot.slane %v182, 1
    %v184 = vmax.f32 %v182, %v183
    %vm185 = vcmp.eq.f32.partialorder %v175, %v184
    %v186 = vsel %vm185, %v177, 4
    %v187 = vsel %vm156, %v186, 2147483647
    %v188 = vrot.slane %v187, 4
    %vm189 = vcmp.lt.s32.totalorder %v187, %v188
    %v190 = vsel %vm189, %v187, %v188
    %v191 = vrot.slane %v190, 2
    %vm192 = vcmp.lt.s32.totalorder %v190, %v191
    %v193 = vsel %vm192, %v190, %v191
    %v194 = vrot.slane %v193, 1
    %vm195 = vcmp.lt.s32.totalorder %v193, %v194
    %v196 = vsel %vm195, %v193, %v194
    %vm197 = vcmp.eq.s32.totalorder %v177, %v196
    %v198 = vsel %vm197, 1, 0
    %v199 = vcvt.s32.f32 %v198
    %v200 = vadd.f32 %v199, 0.0
    %v201 = vsel %vm197, -inf, %v175
    %v202 = vsel %vm156, %v201, -inf
    %v203 = vrot.slane %v202, 4
    %v204 = vmax.f32 %v202, %v203
    %v205 = vrot.slane %v204, 2
    %v206 = vmax.f32 %v204, %v205
    %v207 = vrot.slane %v206, 1
    %v208 = vmax.f32 %v206, %v207
    %vm209 = vcmp.eq.f32.partialorder %v201, %v208
    %v210 = vsel %vm209, %v177, 4
    %v211 = vsel %vm156, %v210, 2147483647
    %v212 = vrot.slane %v211, 4
    %vm213 = vcmp.lt.s32.totalorder %v211, %v212
    %v214 = vsel %vm213, %v211, %v212
    %v215 = vrot.slane %v214, 2
    %vm216 = vcmp.lt.s32.totalorder %v214, %v215
    %v217 = vsel %vm216, %v214, %v215
    %v218 = vrot.slane %v217, 1
    %vm219 = vcmp.lt.s32.totalorder %v217, %v218
    %v220 = vsel %vm219, %v217, %v218
    %vm221 = vcmp.eq.s32.totalorder %v177, %v220
    %v222 = vsel %vm221, 1, 0
    %v223 = vcvt.s32.f32 %v222
    %v224 = vadd.f32 %v200, %v223
    %vm225 = vcmask 1040384
    %v226 = vsel %vm225, %v184, %v208
    %v227 = vsel %vm225, %v196, %v220
    %vm228 = vcmask 1041408
    %v229 = vsel %vm228, %v226, 0.0
    %v230 = vrot.slane %v229, 4
    %v231 = vadd.f32 %v229, %v230
    %v232 = vrot.slane %v231, 2
    %v233 = vadd.f32 %v231, %v232
    %v234 = vrot.slane %v233, 1
    %v235 = vadd.f32 %v233, %v234
    %v236 = vadd.f32 %v235, 1e-20
    %v237 = vrcp.pop %v236
    %v238 = vmul.f32 %v226, %v237
    %239 = vst [vmem:[#allocation2] sm:$0x3] %v227
    %240 = vst [vmem:[#allocation4] sm:$0x3] %v238
    %s241 = smul.u32 0, 128
    %v242 = vadd.s32 %v177, 8
    %v243 = vadd.s32 %v177, 16
    %v244 = vadd.s32 %v177, 24
    %v245 = vadd.s32 %v177, 32
    %v246 = vadd.s32 %v177, 40
    %v247 = vadd.s32 %v177, 48
    %v248 = vadd.s32 %v177, 56
    %v249 = vadd.s32 %v177, 64
    %v250 = vadd.s32 %v177, 72
    %v251 = vadd.s32 %v177, 80
    %v252 = vadd.s32 %v177, 88
    %v253 = vadd.s32 %v177, 96
    %v254 = vadd.s32 %v177, 104
    %v255 = vadd.s32 %v177, 112
    %v256 = vadd.s32 %v177, 120
    %v257 = vstv %s241
    %v258 = vadd.s32 %v177, %v257
    %v259 = vadd.s32 %v242, %v257
    %v260 = vadd.s32 %v243, %v257
    %v261 = vadd.s32 %v244, %v257
    %v262 = vadd.s32 %v245, %v257
    %v263 = vadd.s32 %v246, %v257
    %v264 = vadd.s32 %v247, %v257
    %v265 = vadd.s32 %v248, %v257
    %v266 = vadd.s32 %v249, %v257
    %v267 = vadd.s32 %v250, %v257
    %v268 = vadd.s32 %v251, %v257
    %v269 = vadd.s32 %v252, %v257
    %v270 = vadd.s32 %v253, %v257
    %v271 = vadd.s32 %v254, %v257
    %v272 = vadd.s32 %v255, %v257
    %v273 = vadd.s32 %v256, %v257
    %v274 = vlaneseq
    %v275 = vand.u32 %v274, 127
    %v276 = vmul.u32 %v275, 8
    %vm277 = vcmp.ge.s32.totalorder %v258, %v276
    %vm278 = vcmp.ge.s32.totalorder %v259, %v276
    %vm279 = vcmp.ge.s32.totalorder %v260, %v276
    %vm280 = vcmp.ge.s32.totalorder %v261, %v276
    %vm281 = vcmp.ge.s32.totalorder %v262, %v276
    %vm282 = vcmp.ge.s32.totalorder %v263, %v276
    %vm283 = vcmp.ge.s32.totalorder %v264, %v276
    %vm284 = vcmp.ge.s32.totalorder %v265, %v276
    %vm285 = vcmp.ge.s32.totalorder %v266, %v276
    %vm286 = vcmp.ge.s32.totalorder %v267, %v276
    %vm287 = vcmp.ge.s32.totalorder %v268, %v276
    %vm288 = vcmp.ge.s32.totalorder %v269, %v276
    %vm289 = vcmp.ge.s32.totalorder %v270, %v276
    %vm290 = vcmp.ge.s32.totalorder %v271, %v276
    %vm291 = vcmp.ge.s32.totalorder %v272, %v276
    %vm292 = vcmp.ge.s32.totalorder %v273, %v276
    %v293 = vadd.s32 %v276, 8
    %vm294 = vcmp.lt.s32.totalorder %v258, %v293
    %vm295 = vcmp.lt.s32.totalorder %v259, %v293
    %vm296 = vcmp.lt.s32.totalorder %v260, %v293
    %vm297 = vcmp.lt.s32.totalorder %v261, %v293
    %vm298 = vcmp.lt.s32.totalorder %v262, %v293
    %vm299 = vcmp.lt.s32.totalorder %v263, %v293
    %vm300 = vcmp.lt.s32.totalorder %v264, %v293
    %vm301 = vcmp.lt.s32.totalorder %v265, %v293
    %vm302 = vcmp.lt.s32.totalorder %v266, %v293
    %vm303 = vcmp.lt.s32.totalorder %v267, %v293
    %vm304 = vcmp.lt.s32.totalorder %v268, %v293
    %vm305 = vcmp.lt.s32.totalorder %v269, %v293
    %vm306 = vcmp.lt.s32.totalorder %v270, %v293
    %vm307 = vcmp.lt.s32.totalorder %v271, %v293
    %vm308 = vcmp.lt.s32.totalorder %v272, %v293
    %vm309 = vcmp.lt.s32.totalorder %v273, %v293
    %vm310 = vmand %vm277, %vm294
    %vm311 = vmand %vm278, %vm295
    %vm312 = vmand %vm279, %vm296
    %vm313 = vmand %vm280, %vm297
    %vm314 = vmand %vm281, %vm298
    %vm315 = vmand %vm282, %vm299
    %vm316 = vmand %vm283, %vm300
    %vm317 = vmand %vm284, %vm301
    %vm318 = vmand %vm285, %vm302
    %vm319 = vmand %vm286, %vm303
    %vm320 = vmand %vm287, %vm304
    %vm321 = vmand %vm288, %vm305
    %vm322 = vmand %vm289, %vm306
    %vm323 = vmand %vm290, %vm307
    %vm324 = vmand %vm291, %vm308
    %vm325 = vmand %vm292, %vm309
    %v326 = vsel %vm310, 1, 0
    %v327 = vsel %vm311, 1, 0
    %v328 = vsel %vm312, 1, 0
    %v329 = vsel %vm313, 1, 0
    %v330 = vsel %vm314, 1, 0
    %v331 = vsel %vm315, 1, 0
    %v332 = vsel %vm316, 1, 0
    %v333 = vsel %vm317, 1, 0
    %v334 = vsel %vm318, 1, 0
    %v335 = vsel %vm319, 1, 0
    %v336 = vsel %vm320, 1, 0
    %v337 = vsel %vm321, 1, 0
    %v338 = vsel %vm322, 1, 0
    %v339 = vsel %vm323, 1, 0
    %v340 = vsel %vm324, 1, 0
    %v341 = vsel %vm325, 1, 0
    %v342 = vcvt.s32.f32 %v326
    %v343 = vcvt.s32.f32 %v327
    %v344 = vcvt.s32.f32 %v328
    %v345 = vcvt.s32.f32 %v329
    %v346 = vcvt.s32.f32 %v330
    %v347 = vcvt.s32.f32 %v331
    %v348 = vcvt.s32.f32 %v332
    %v349 = vcvt.s32.f32 %v333
    %v350 = vcvt.s32.f32 %v334
    %v351 = vcvt.s32.f32 %v335
    %v352 = vcvt.s32.f32 %v336
    %v353 = vcvt.s32.f32 %v337
    %v354 = vcvt.s32.f32 %v338
    %v355 = vcvt.s32.f32 %v339
    %v356 = vcvt.s32.f32 %v340
    %v357 = vcvt.s32.f32 %v341
    %358 = vmatprep.subr.mxu0 0.0
    %359 = vmatpush1.msra.mxu0 %v357
    %360 = vmatprep.subr.mxu0 0.0
    %361 = vmatpush1.msra.mxu0 %v356
    %362 = vmatprep.subr.mxu0 0.0
    %363 = vmatpush1.msra.mxu0 %v355
    %364 = vmatprep.subr.mxu0 0.0
    %365 = vmatpush1.msra.mxu0 %v354
    %366 = vmatprep.subr.mxu0 0.0
    %367 = vmatpush1.msra.mxu0 %v353
    %368 = vmatprep.subr.mxu0 0.0
    %369 = vmatpush1.msra.mxu0 %v352
    %370 = vmatprep.subr.mxu0 0.0
    %371 = vmatpush1.msra.mxu0 %v351
    %372 = vmatprep.subr.mxu0 0.0
    %373 = vmatpush1.msra.mxu0 %v350
    %374 = vmatprep.subr.mxu0 0.0
    %375 = vmatpush1.msra.mxu0 %v349
    %376 = vmatprep.subr.mxu0 0.0
    %377 = vmatpush1.msra.mxu0 %v348
    %378 = vmatprep.subr.mxu0 0.0
    %379 = vmatpush1.msra.mxu0 %v347
    %380 = vmatprep.subr.mxu0 0.0
    %381 = vmatpush1.msra.mxu0 %v346
    %382 = vmatprep.subr.mxu0 0.0
    %383 = vmatpush1.msra.mxu0 %v345
    %384 = vmatprep.subr.mxu0 0.0
    %385 = vmatpush1.msra.mxu0 %v344
    %386 = vmatprep.subr.mxu0 0.0
    %387 = vmatpush1.msra.mxu0 %v343
    %388 = vmatprep.subr.mxu0 0.0
    %389 = vmatpush1.msra.mxu0 %v342
    %390 = vmatprep.subr.mxu0 0.0
    %391 = vmatpush2.msra.mxu0 0.0
    %392 = vmatprep.subr.mxu0 0.0
    %393 = vmatpush2.msra.mxu0 0.0
    %394 = vmatprep.subr.mxu0 0.0
    %395 = vmatpush2.msra.mxu0 0.0
    %396 = vmatprep.subr.mxu0 0.0
    %397 = vmatpush2.msra.mxu0 0.0
    %398 = vmatprep.subr.mxu0 0.0
    %399 = vmatpush2.msra.mxu0 0.0
    %400 = vmatprep.subr.mxu0 0.0
    %401 = vmatpush2.msra.mxu0 0.0
    %402 = vmatprep.subr.mxu0 0.0
    %403 = vmatpush2.msra.mxu0 0.0
    %404 = vmatprep.subr.mxu0 0.0
    %405 = vmatpush2.msra.mxu0 0.0
    %406 = vmatprep.subr.mxu0 0.0
    %407 = vmatpush2.msra.mxu0 0.0
    %408 = vmatprep.subr.mxu0 0.0
    %409 = vmatpush2.msra.mxu0 0.0
    %410 = vmatprep.subr.mxu0 0.0
    %411 = vmatpush2.msra.mxu0 0.0
    %412 = vmatprep.subr.mxu0 0.0
    %413 = vmatpush2.msra.mxu0 0.0
    %414 = vmatprep.subr.mxu0 0.0
    %415 = vmatpush2.msra.mxu0 0.0
    %416 = vmatprep.subr.mxu0 0.0
    %417 = vmatpush2.msra.mxu0 0.0
    %418 = vmatprep.subr.mxu0 0.0
    %419 = vmatpush2.msra.mxu0 0.0
    %420 = vmatprep.subr.mxu0 0.0
    %421 = vmatpush2.msra.mxu0 0.0
    %422 = vmatprep.mubr.f32.mxu0 0.0
    %423 = vmatmul.mubr.f32.gmra.mxu0 %v175
    %v424 = vpop.f32.mrf.mxu0
    %v425 = vadd.f32 0.0, %v424
    %v426 = vpop.f32.mrf.mxu0
    %427 = vdwg.mxu0
    %vm428 = vcmask 11264
    %429 = vst.msk [vmem:[%s4] sm:$0xf] %vm428, %v425
    %430 = vmatprep.subr.mxu0 0.0
    %431 = vmatpush1.msra.mxu0 %v357
    %432 = vmatprep.subr.mxu0 0.0
    %433 = vmatpush1.msra.mxu0 %v356
    %434 = vmatprep.subr.mxu0 0.0
    %435 = vmatpush1.msra.mxu0 %v355
    %436 = vmatprep.subr.mxu0 0.0
    %437 = vmatpush1.msra.mxu0 %v354
    %438 = vmatprep.subr.mxu0 0.0
    %439 = vmatpush1.msra.mxu0 %v353
    %440 = vmatprep.subr.mxu0 0.0
    %441 = vmatpush1.msra.mxu0 %v352
    %442 = vmatprep.subr.mxu0 0.0
    %443 = vmatpush1.msra.mxu0 %v351
    %444 = vmatprep.subr.mxu0 0.0
    %445 = vmatpush1.msra.mxu0 %v350
    %446 = vmatprep.subr.mxu0 0.0
    %447 = vmatpush1.msra.mxu0 %v349
    %448 = vmatprep.subr.mxu0 0.0
    %449 = vmatpush1.msra.mxu0 %v348
    %450 = vmatprep.subr.mxu0 0.0
    %451 = vmatpush1.msra.mxu0 %v347
    %452 = vmatprep.subr.mxu0 0.0
    %453 = vmatpush1.msra.mxu0 %v346
    %454 = vmatprep.subr.mxu0 0.0
    %455 = vmatpush1.msra.mxu0 %v345
    %456 = vmatprep.subr.mxu0 0.0
    %457 = vmatpush1.msra.mxu0 %v344
    %458 = vmatprep.subr.mxu0 0.0
    %459 = vmatpush1.msra.mxu0 %v343
    %460 = vmatprep.subr.mxu0 0.0
    %461 = vmatpush1.msra.mxu0 %v342
    %462 = vmatprep.subr.mxu0 0.0
    %463 = vmatpush2.msra.mxu0 0.0
    %464 = vmatprep.subr.mxu0 0.0
    %465 = vmatpush2.msra.mxu0 0.0
    %466 = vmatprep.subr.mxu0 0.0
    %467 = vmatpush2.msra.mxu0 0.0
    %468 = vmatprep.subr.mxu0 0.0
    %469 = vmatpush2.msra.mxu0 0.0
    %470 = vmatprep.subr.mxu0 0.0
    %471 = vmatpush2.msra.mxu0 0.0
    %472 = vmatprep.subr.mxu0 0.0
    %473 = vmatpush2.msra.mxu0 0.0
    %474 = vmatprep.subr.mxu0 0.0
    %475 = vmatpush2.msra.mxu0 0.0
    %476 = vmatprep.subr.mxu0 0.0
    %477 = vmatpush2.msra.mxu0 0.0
    %478 = vmatprep.subr.mxu0 0.0
    %479 = vmatpush2.msra.mxu0 0.0
    %480 = vmatprep.subr.mxu0 0.0
    %481 = vmatpush2.msra.mxu0 0.0
    %482 = vmatprep.subr.mxu0 0.0
    %483 = vmatpush2.msra.mxu0 0.0
    %484 = vmatprep.subr.mxu0 0.0
    %485 = vmatpush2.msra.mxu0 0.0
    %486 = vmatprep.subr.mxu0 0.0
    %487 = vmatpush2.msra.mxu0 0.0
    %488 = vmatprep.subr.mxu0 0.0
    %489 = vmatpush2.msra.mxu0 0.0
    %490 = vmatprep.subr.mxu0 0.0
    %491 = vmatpush2.msra.mxu0 0.0
    %492 = vmatprep.subr.mxu0 0.0
    %493 = vmatpush2.msra.mxu0 0.0
    %494 = vmatprep.mubr.f32.mxu0 0.0
    %495 = vmatmul.mubr.f32.gmra.mxu0 %v224
    %v496 = vpop.f32.mrf.mxu0
    %v497 = vadd.f32 0.0, %v496
    %v498 = vpop.f32.mrf.mxu0
    %499 = vdwg.mxu0
    %500 = vst.msk [vmem:[%s5] sm:$0xf] %vm428, %v497
    // Predicated region
    $region10: #{tpu_custom_call.1} parent=1 // pred_check
      _
    $region11: #{tpu_custom_call.1} parent=1 // pred_check_branch
      %502 = sbr.rel (0) target = $region13
    $region12: #{tpu_custom_call.1} parent=1 // pred_region
      %s504 = ssub.s32 32, 32
      %505 = vsyncadd [#allocation3], %s504
      %s507 = sshll.u32 [#allocation2], 4
      %s508 = int_to_ptr.vmem [resolvable:$true] %s507
      %510 = dma.vmem_to_hbm [thread:$0]  %s508, 32, %s2, [#allocation3]
    $region13: #{tpu_custom_call.1} parent=1 // pred_fallthru
      _
    // Predicated region
    $region14: #{tpu_custom_call.1} parent=1 // pred_check
      _
    $region15: #{tpu_custom_call.1} parent=1 // pred_check_branch
      %512 = sbr.rel (0) target = $region17
    $region16: #{tpu_custom_call.1} parent=1 // pred_region
      %s514 = ssub.s32 32, 32
      %515 = vsyncadd [#allocation5], %s514
      %s517 = sshll.u32 [#allocation4], 4
      %s518 = int_to_ptr.vmem [resolvable:$true] %s517
      %520 = dma.vmem_to_hbm [thread:$0]  %s518, 32, %s3, [#allocation5]
    $region17: #{tpu_custom_call.1} parent=1 // pred_fallthru
      _
    // Predicated region
    $region18: #{tpu_custom_call.1} parent=1 // pred_check
      _
    $region19: #{tpu_custom_call.1} parent=1 // pred_check_branch
      %522 = sbr.rel (0) target = $region21
    $region20: #{tpu_custom_call.1} parent=1 // pred_region
      _
    $region21: #{tpu_custom_call.1} parent=1 // pred_fallthru
      _
    // Predicated region
    $region22: #{tpu_custom_call.1} parent=1 // pred_check
      _
    $region23: #{tpu_custom_call.1} parent=1 // pred_check_branch
      %524 = sbr.rel (0) target = $region25
    $region24: #{tpu_custom_call.1} parent=1 // pred_region
      _
    $region25: #{tpu_custom_call.1} parent=1 // pred_fallthru
      _
    // Predicated region
    $region26: #{tpu_custom_call.1} parent=1 // pred_check
      _
    $region27: #{tpu_custom_call.1} parent=1 // pred_check_branch
      %526 = sbr.rel (0) target = $region29
    $region28: #{tpu_custom_call.1} parent=1 // pred_region
      %527 = dma.done [#allocation3], 32
    $region29: #{tpu_custom_call.1} parent=1 // pred_fallthru
      _
    // Predicated region
    $region30: #{tpu_custom_call.1} parent=1 // pred_check
      _
    $region31: #{tpu_custom_call.1} parent=1 // pred_check_branch
      %529 = sbr.rel (0) target = $region33
    $region32: #{tpu_custom_call.1} parent=1 // pred_region
      %530 = dma.done [#allocation5], 32
    $region33: #{tpu_custom_call.1} parent=1 // pred_fallthru
      _
    // Predicated region
    $region34: #{tpu_custom_call.1} parent=1 // pred_check
      _
    $region35: #{tpu_custom_call.1} parent=1 // pred_check_branch
      %532 = sbr.rel (0) target = $region37
    $region36: #{tpu_custom_call.1} parent=1 // pred_region
      _
    $region37: #{tpu_custom_call.1} parent=1 // pred_fallthru
      _
    // Predicated region
    $region38: #{tpu_custom_call.1} parent=1 // pred_check
      _
    $region39: #{tpu_custom_call.1} parent=1 // pred_check_branch
      %534 = sbr.rel (0) target = $region41
    $region40: #{tpu_custom_call.1} parent=1 // pred_region
      _
    $region41: #{tpu_custom_call.1} parent=1 // pred_fallthru
      _
    %535 = vsyncpa [#allocation3], 1
    %536 = vsyncpa [#allocation5], 1

</llo_original>
